<compile_context>
chip_gen: v6e
topology: v6e:2x2x1
jax: 0.10.0
libtpu: 0.0.40
codegen_flags: <defaults>
</compile_context>

<pallas_src>
import jax
import jax.numpy as jnp
from jax.experimental import pallas as pl
from jax.experimental.pallas import tpu as pltpu


# ---------------------------------------------------------------------------
# Kernel body: one [row_tile, H*W] activation tile per grid step.
# ---------------------------------------------------------------------------
def _make_layer_scale_kernel(gamma_resident: bool, row_tile: int):
    def kernel(x_ref, g_ref, o_ref):
        if gamma_resident:
            # Resident gamma column: slice this tile's rows (start is always a
            # multiple of 8 because row_tile is sublane-aligned, or start==0).
            start = pl.multiple_of(pl.program_id(0) * row_tile, 8)
            g = g_ref[pl.ds(start, row_tile), :]
        else:
            g = g_ref[...]
        # PyTorch-style promotion: cast x up to the output dtype in-register
        # (a no-op when the dtypes already match), multiply on the VPU with a
        # lane-broadcast of the per-row gamma scalar.
        o_ref[...] = x_ref[...].astype(o_ref.dtype) * g

    return kernel


# ---------------------------------------------------------------------------
# Helpers
# ---------------------------------------------------------------------------
def _round_down(x: int, m: int) -> int:
    return (x // m) * m


def _round_up(x: int, m: int) -> int:
    return -(-x // m) * m


def _vmem_capacity_bytes() -> int:
    """Per-core physical VMEM; conservative 64 MiB (v7x) if the query fails."""
    try:
        cap = getattr(pltpu.get_tpu_info(), "vmem_capacity_bytes", None)
        if cap:
            return int(cap)
    except Exception:
        pass
    return 64 * 1024 * 1024


# ---------------------------------------------------------------------------
# Wrapper: NCHW in, NCHW out.  No layout transposes anywhere.
# ---------------------------------------------------------------------------
def layer_scale_pallas(x, gamma, *, in_place: bool = False):
    """MNV4LayerScale forward: x[B,C,H,W] * gamma[C] broadcast over (B,H,W)."""
    B, C, H, W = x.shape
    assert gamma.shape == (C,)
    R, HW = B * C, H * W
    out_dtype = jnp.result_type(x.dtype, gamma.dtype)

    x_dsize = jnp.dtype(x.dtype).itemsize
    o_dsize = jnp.dtype(out_dtype).itemsize
    # Sublane-packing alignment for the row dim: 8 (f32) / 16 (bf16) / 32 (i8).
    align = max(8, 32 // min(x_dsize, o_dsize))

    # ---- generation-aware VMEM budget --------------------------------------
    capacity = _vmem_capacity_bytes()
    vmem_limit = (capacity * 3) // 4       # headroom for scratch / 2nd core
    budget = vmem_limit // 2               # bytes allowed for block buffers
    buf_in = 3 if capacity >= 100 * 1024 * 1024 else 2  # deeper pipe on v5e/v6e

    # ---- gamma residency decision -------------------------------------------
    # A resident [R,1] block pads its single column to 128 lanes in VMEM.
    gamma_cost = 2 * _round_up(max(R, 1), 8) * 128 * o_dsize
    gamma_resident = gamma_cost <= budget // 4
    slab_budget = budget - (gamma_cost if gamma_resident else 0)

    # ---- row tile from the byte budget, capped for >= 4 grid steps ----------
    hw_pad = _round_up(HW, 128)            # VMEM lane padding per row
    per_row = buf_in * hw_pad * x_dsize + 2 * hw_pad * o_dsize
    tr = max(align, _round_down(slab_budget // per_row, align))
    min_steps = 4                          # pipelining + both v7x TensorCores
    if R >= min_steps * align:
        tr = min(tr, max(align, _round_down(pl.cdiv(R, min_steps), align)))
    tr = min(tr, R)
    if tr < R and tr % align:
        tr = max(align, _round_down(tr, align))
    num_steps = pl.cdiv(R, tr)             # partial last block is masked
    grid = (num_steps,)

    # ---- operands: contiguous views only ------------------------------------
    x2 = x.reshape(R, HW)
    g_row = jnp.tile(gamma.astype(out_dtype), B)        # row r -> gamma[r % C]
    r_pad = num_steps * tr if gamma_resident else R
    if r_pad > R:
        # Pad rows so the in-kernel slice for the partial last tile stays
        # in bounds (padded rows are never written back).
        g_row = jnp.concatenate([g_row, jnp.zeros((r_pad - R,), out_dtype)])
    g2 = g_row.reshape(r_pad, 1)

    # ---- specs ---------------------------------------------------------------
    x_spec_kwargs = {}
    if buf_in >= 3:
        # Third input buffer hides DMA jitter on v5e/v6e (128 MiB VMEM);
        # the output stays at the default depth of 2.
        x_spec_kwargs["pipeline_mode"] = pl.Buffered(buf_in)
    x_spec = pl.BlockSpec((tr, HW), lambda i: (i, 0), **x_spec_kwargs)
    if gamma_resident:
        g_spec = pl.BlockSpec((r_pad, 1), lambda i: (0, 0))  # fetched once
    else:
        g_spec = pl.BlockSpec((tr, 1), lambda i: (i, 0))
    out_spec = pl.BlockSpec((tr, HW), lambda i: (i, 0))

    aliases = {}
    if in_place and jnp.dtype(x.dtype) == jnp.dtype(out_dtype):
        aliases = {0: 0}  # write the result over x (caller donates x)

    out2 = pl.pallas_call(
        _make_layer_scale_kernel(gamma_resident, tr),
        out_shape=jax.ShapeDtypeStruct((R, HW), out_dtype),
        grid_spec=pltpu.PrefetchScalarGridSpec(
            num_scalar_prefetch=0,
            grid=grid,
            in_specs=[x_spec, g_spec],
            out_specs=out_spec,
        ),
        compiler_params=pltpu.CompilerParams(
            dimension_semantics=("parallel",),  # independent row tiles
            vmem_limit_bytes=int(vmem_limit),
        ),
        input_output_aliases=aliases,
    )(x2, g2)

    return out2.reshape(B, C, H, W)


# ---------------------------------------------------------------------------
# Pure-JAX reference (mirrors the PyTorch forward) for correctness checking.
# ---------------------------------------------------------------------------
def layer_scale_reference(x, gamma):
    return x * gamma[None, :, None, None]


if __name__ == "__main__":
    key = jax.random.PRNGKey(0)
    k1, k2, k3, k4 = jax.random.split(key, 4)
    init_values = 1e-5

    # --- Case 1: f32, H*W a 128-multiple, 4-step parallel grid ---------------
    B, C, H, W = 2, 32, 16, 16
    x = jax.random.normal(k1, (B, C, H, W), jnp.float32)
    gamma = init_values * jnp.ones((C,), jnp.float32) \
        + 0.01 * jax.random.normal(k2, (C,), jnp.float32)
    out = jax.block_until_ready(layer_scale_pallas(x, gamma))
    ref = layer_scale_reference(x, gamma)
    assert out.shape == ref.shape and out.dtype == ref.dtype
    assert jnp.allclose(out, ref, atol=1e-6, rtol=1e-6), "case 1 mismatch"

    # --- Case 2: bf16 activations * f32 gamma (PyTorch-style promotion),
    #     H*W = 196 (not a 128-multiple -> masked lanes), rows not divisible
    #     by the tile (partial last block + padded resident gamma). -----------
    B2, C2, H2, W2 = 2, 36, 14, 14
    x2 = jax.random.normal(k3, (B2, C2, H2, W2), jnp.float32).astype(jnp.bfloat16)
    gamma2 = init_values * jnp.ones((C2,), jnp.float32) \
        + 0.01 * jax.random.normal(k4, (C2,), jnp.float32)
    out2 = jax.block_until_ready(layer_scale_pallas(x2, gamma2))
    ref2 = layer_scale_reference(x2, gamma2)
    assert out2.shape == ref2.shape and out2.dtype == ref2.dtype
    assert out2.dtype == jnp.float32
    assert jnp.allclose(out2, ref2, atol=1e-6, rtol=1e-5), "case 2 mismatch"

    print("KERNEL_OK")
</pallas_src>

<mosaic_0001>
module attributes {stable_mosaic.version = 11 : i64} {
  func.func @kernel(%arg0: i32, %arg1: memref<16x256xf32, #tpu.memory_space<vmem>>, %arg2: memref<64x1xf32, #tpu.memory_space<vmem>>, %arg3: memref<16x256xf32, #tpu.memory_space<vmem>>) attributes {dimension_semantics = [#tpu.dimension_semantics<parallel>], iteration_bounds = array<i64: 4>, scalar_prefetch = 0 : i64, scratch_operands = 0 : i64, tpu.core_type = #tpu.core_type<tc>, window_params = [{transform_indices = @transform_0, window_bounds = array<i64: 16, 256>}, {pipeline_mode = #tpu.pipeline_mode<synchronous>, transform_indices = @transform_1, window_bounds = array<i64: 64, 1>}, {transform_indices = @transform_2, window_bounds = array<i64: 16, 256>}]} {
    %c16_i32 = arith.constant 16 : i32
    %0 = arith.muli %arg0, %c16_i32 : i32
    %1 = tpu.assume_multiple %0, 8 : i32
    %2 = arith.index_cast %1 : i32 to index
    %c0 = arith.constant 0 : index
    %3 = vector.load %arg2[%2, %c0] : memref<64x1xf32, #tpu.memory_space<vmem>>, vector<16x1xf32>
    %c0_0 = arith.constant 0 : index
    %c0_1 = arith.constant 0 : index
    %4 = vector.load %arg1[%c0_0, %c0_1] : memref<16x256xf32, #tpu.memory_space<vmem>>, vector<16x256xf32>
    %5 = vector.broadcast %3 : vector<16x1xf32> to vector<16x256xf32>
    %6 = arith.mulf %4, %5 : vector<16x256xf32>
    %c0_2 = arith.constant 0 : index
    %c0_3 = arith.constant 0 : index
    %7 = vector.load %arg3[%c0_2, %c0_3] : memref<16x256xf32, #tpu.memory_space<vmem>>, vector<16x256xf32>
    tpu.vector_store %arg3[%c0_2, %c0_3], %6 {strides = array<i32>} : memref<16x256xf32, #tpu.memory_space<vmem>>, vector<16x256xf32>,
    return
  }
  func.func @transform_0(%arg0: i32) -> (i32, i32) {
    %c0_i32 = arith.constant 0 : i32
    %c0_i32_0 = arith.constant 0 : i32
    return %arg0, %c0_i32 : i32, i32
  }
  func.func @transform_1(%arg0: i32) -> (i32, i32) {
    %c0_i32 = arith.constant 0 : i32
    %c0_i32_0 = arith.constant 0 : i32
    %c0_i32_1 = arith.constant 0 : i32
    return %c0_i32, %c0_i32_0 : i32, i32
  }
  func.func @transform_2(%arg0: i32) -> (i32, i32) {
    %c0_i32 = arith.constant 0 : i32
    %c0_i32_0 = arith.constant 0 : i32
    return %arg0, %c0_i32 : i32, i32
  }
}

</mosaic_0001>

<llo_original>
// kernel: tpu_custom_call.1
$region0: #{tpu_custom_call.1}
  #allocation0 [shape = 'u32[]', space=smem, size = 0x4, offset = 0x4, fixed_abs, tag = 'smem constant byte address 0x4 - core index']
  #allocation1 [shape = 'u32[144,128]{1,0:T(1,128)}', space=vmem, size = 0x12000, scoped, tag = 'internal scratch']
  %s0 = inlined_call_operand.hbm [shape: f32[64,256], index: 0, kind: input, shape index: {}]
  %s1 = inlined_call_operand.vmem [shape: f32[64,1], index: 1, kind: input, shape index: {}]
  %s2 = inlined_call_operand.hbm [shape: f32[64,256], index: 2, kind: output, shape index: {}]
  %s3 = sld [smem:[#allocation0]]
  $region45: #{tpu_custom_call.1} parent=0
    _
  %s5 = ssub.s32 1, %s3
  %s6 = scalar_select 0, %s5, %s3
  $region1: #{tpu_custom_call.1} parent=0
    #allocation2 [shape = 'u8[32768]{0}', space=vmem, size = 0x8000, scoped, tag = 'input window, operand 0']
    #allocation3 [shape = 's32[2]{0}', space=sflag, size = 0x8, scoped, tag = 'scoped memory for tpu_custom_call.1']
    #allocation4 [shape = 's32[2]{0}', space=sflag, size = 0x8, scoped, tag = 'scoped memory for tpu_custom_call.1']
    #allocation5 [shape = 'u8[32768]{0}', space=vmem, size = 0x8000, scoped, tag = 'output window, operand 0']
    %7 = vsyncpa [#allocation3], 0
    %s8 = scalar_lea.sflag [#allocation3], 1
    %9 = vsyncpa %s8, 0
    %10 = vsyncpa [#allocation4], 0
    %s11 = scalar_lea.sflag [#allocation4], 1
    %12 = vsyncpa %s11, 0
    loop: start=0, step=1, limit=6
    $region2: #{tpu_custom_call.1} parent=1 // loop_pre_header
      _
    $region3: #{tpu_custom_call.1} parent=1 // loop_header
      %s14 = sphi 0, %s18
      %p15 = scmp.ge.s32.totalorder %s14, 6
      %s24 = sphi 0, %s26
      %s27 = sphi 0, %s24
      %s28 = sphi 0, %s27
      %s44 = sphi 0, %s28
      %s48 = sphi 0, %s48
      %s50 = sphi 0, %s48
      %s51 = sphi 0, %s50
      %s65 = sphi 0, %s51
      %s71 = sphi 0, %s73
      %s74 = sphi 0, %s71
      %s75 = sphi 0, %s74
      %s91 = sphi 0, %s75
    $region4: #{tpu_custom_call.1} parent=1 // loop_header_branch
      %17 = sbr.rel (%p15) target = $region8
    $region5: #{tpu_custom_call.1} parent=1 // loop_body
      %s19 = ssub.s32 %s14, 1
      %s20 = ssub.s32 %s14, 2
      %s21 = sadd.s32 %s14, 1
      %s22 = ssub.s32 %s14, %s21
      %p23 = scmp.eq.s32.totalorder %s22, 0
      %s25 = sadd.s32 %s24, 1
      %s26 = scalar_select %p23, %s24, %s25
      %p29 = pneg %p23
      %p30 = scmp.eq.s32.totalorder %s14, 3
      %p31 = por %p29, %p30
      %p32 = scmp.ne.s32.totalorder %s24, %s27
      %p33 = scmp.eq.s32.totalorder %s14, 0
      %p34 = por %p32, %p33
      %p35 = scmp.ne.s32.totalorder %s24, %s27
      %p36 = scmp.eq.s32.totalorder %s19, 3
      %p37 = por %p35, %p36
      %p38 = scmp.ne.s32.totalorder %s27, %s28
      %p39 = scmp.eq.s32.totalorder %s19, 0
      %p40 = por %p38, %p39
      %p41 = scmp.ne.s32.totalorder %s27, %s28
      %p42 = scmp.eq.s32.totalorder %s20, 3
      %p43 = por %p41, %p42
      %p45 = scmp.ne.s32.totalorder %s28, %s44
      %p46 = scmp.eq.s32.totalorder %s20, 0
      %p47 = por %p45, %p46
      %s49 = sadd.s32 %s48, 1
      %p52 = scmp.eq.s32.totalorder %s14, 3
      %p53 = scmp.ne.s32.totalorder %s48, %s50
      %p54 = scmp.eq.s32.totalorder %s14, 0
      %p55 = por %p53, %p54
      %p56 = scmp.ne.s32.totalorder %s48, %s50
      %p57 = scmp.eq.s32.totalorder %s19, 3
      %p58 = por %p56, %p57
      %p59 = scmp.ne.s32.totalorder %s50, %s51
      %p60 = scmp.eq.s32.totalorder %s19, 0
      %p61 = por %p59, %p60
      %p62 = scmp.ne.s32.totalorder %s50, %s51
      %p63 = scmp.eq.s32.totalorder %s20, 3
      %p64 = por %p62, %p63
      %p66 = scmp.ne.s32.totalorder %s51, %s65
      %p67 = scmp.eq.s32.totalorder %s20, 0
      %p68 = por %p66, %p67
      %s69 = ssub.s32 %s14, %s21
      %p70 = scmp.eq.s32.totalorder %s69, 0
      %s72 = sadd.s32 %s71, 1
      %s73 = scalar_select %p70, %s71, %s72
      %p76 = pneg %p70
      %p77 = scmp.eq.s32.totalorder %s14, 3
      %p78 = por %p76, %p77
      %p79 = scmp.ne.s32.totalorder %s71, %s74
      %p80 = scmp.eq.s32.totalorder %s14, 0
      %p81 = por %p79, %p80
      %p82 = scmp.ne.s32.totalorder %s71, %s74
      %p83 = scmp.eq.s32.totalorder %s19, 3
      %p84 = por %p82, %p83
      %p85 = scmp.ne.s32.totalorder %s74, %s75
      %p86 = scmp.eq.s32.totalorder %s19, 0
      %p87 = por %p85, %p86
      %p88 = scmp.ne.s32.totalorder %s74, %s75
      %p89 = scmp.eq.s32.totalorder %s20, 3
      %p90 = por %p88, %p89
      %p92 = scmp.ne.s32.totalorder %s75, %s91
      %p93 = scmp.eq.s32.totalorder %s20, 0
      %p94 = por %p92, %p93
      %p95 = scmp.le.s32.totalorder 1, %s14
      %p96 = scmp.lt.s32.totalorder %s14, 5
      %p97 = pnand %p95, %p96
      %p98 = pneg %p97
      // Predicated region
      $region9: #{tpu_custom_call.1} parent=5 // pred_check
        _
      $region10: #{tpu_custom_call.1} parent=5 // pred_check_branch
        %100 = sbr.rel (%p97) target = $region12
      $region11: #{tpu_custom_call.1} parent=5 // pred_region
        %s101 = ssub.s32 %s14, 1
        // Predicated region
        $region13: #{tpu_custom_call.1} parent=11 // pred_check
          %p102 = pneg %p61
        $region14: #{tpu_custom_call.1} parent=11 // pred_check_branch
          %104 = sbr.rel (%p102) target = $region16
        $region15: #{tpu_custom_call.1} parent=11 // pred_region
          _
        $region16: #{tpu_custom_call.1} parent=11 // pred_fallthru
          _
      $region12: #{tpu_custom_call.1} parent=5 // pred_fallthru
        _
      %p105 = scmp.lt.s32.totalorder %s14, 4
      // Predicated region
      $region17: #{tpu_custom_call.1} parent=5 // pred_check
        %p106 = pneg %p105
      $region18: #{tpu_custom_call.1} parent=5 // pred_check_branch
        %108 = sbr.rel (%p106) target = $region20
      $region19: #{tpu_custom_call.1} parent=5 // pred_region
        // Predicated region
        $region21: #{tpu_custom_call.1} parent=19 // pred_check
          %p109 = pneg %p34
        $region22: #{tpu_custom_call.1} parent=19 // pred_check_branch
          %111 = sbr.rel (%p109) target = $region24
        $region23: #{tpu_custom_call.1} parent=19 // pred_region
          %s112 = sand.u32 %s24, 1
          %s113 = scalar_lea.sflag [#allocation3], %s112
          %s114 = sand.u32 %s24, 1
          %s115 = smul.addr %s114, 32
          %s116 = scalar_lea.vmem [#allocation2], %s115
          %s117 = smul.u32 2, %s14
          %s119 = ssub.s32 512, 512
          %120 = vsyncadd %s113, %s119
          %s121 = smul.addr %s117, 2
          %s122 = smul.addr %s121, 128
          %s123 = scalar_lea.hbm %s0, %s122
          %s124 = sshll.u32 %s116, 4
          %s125 = int_to_ptr.vmem [resolvable:$true] %s124
          %130 = dma.hbm_to_vmem [thread:$0]  %s123, 512, %s125, %s113, 256, 256, 16
        $region24: #{tpu_custom_call.1} parent=19 // pred_fallthru
          _
      $region20: #{tpu_custom_call.1} parent=5 // pred_fallthru
        _
      %p131 = scmp.le.s32.totalorder 1, %s14
      %p132 = scmp.lt.s32.totalorder %s14, 5
      %p133 = pnand %p131, %p132
      %p134 = pneg %p133
      // Predicated region
      $region25: #{tpu_custom_call.1} parent=5 // pred_check
        _
      $region26: #{tpu_custom_call.1} parent=5 // pred_check_branch
        %136 = sbr.rel (%p133) target = $region28
      $region27: #{tpu_custom_call.1} parent=5 // pred_region
        %s137 = ssub.s32 %s14, 1
        %s138 = sand.u32 %s27, 1
        %s139 = scalar_lea.sflag [#allocation3], %s138
        %s140 = sand.u32 %s27, 1
        %s141 = smul.addr %s140, 32
        %s142 = scalar_lea.vmem [#allocation2], %s141
        // Predicated region
        $region29: #{tpu_custom_call.1} parent=27 // pred_check
          %p143 = pneg %p40
        $region30: #{tpu_custom_call.1} parent=27 // pred_check_branch
          %145 = sbr.rel (%p143) target = $region32
        $region31: #{tpu_custom_call.1} parent=27 // pred_region
          %146 = dma.done %s139, 512
        $region32: #{tpu_custom_call.1} parent=27 // pred_fallthru
          _
        %s147 = sand.u32 %s27, 1
        %s148 = scalar_lea.sflag [#allocation3], %s147
        %s149 = sand.u32 %s27, 1
        %s150 = smul.addr %s149, 32
        %s151 = scalar_lea.vmem [#allocation2], %s150
        %p152 = pneg %p40
        %p153 = pneg %p37
        %p154 = pneg %p61
        %p155 = pneg %p58
        %p156 = pneg %p87
        %p157 = pneg %p84
        %s158 = sand.u32 %s74, 1
        %s159 = scalar_lea.sflag [#allocation4], %s158
        %s160 = sand.u32 %s74, 1
        %s161 = smul.addr %s160, 32
        %s162 = scalar_lea.vmem [#allocation5], %s161
        %s163 = smul.u32 2, %s19
        %s164 = smul.u32 2, %s19
        %s165 = smul.u32 %s19, 16
        %s166 = scalar_lea.vmem %s1, %s165
        %v167 = vld [vmem:[%s166] sm:$0xff]
        %v168 = vld [vmem:[%s166 + $0x8] sm:$0xff]
        %v169 = vld [vmem:[%s142] sm:$0xff]
        %v170 = vld [vmem:[%s142 + $0x8] sm:$0xff]
        %v171 = vld [vmem:[%s142 + $0x10] sm:$0xff]
        %v172 = vld [vmem:[%s142 + $0x18] sm:$0xff]
        %174 = vset.pattern.permute.xlu0 0
        %175 = vperm.xlu0 %174, %v167
        %v176 = vpop.permute.xlu0 %175
        %179 = vset.pattern.permute.xlu0 0
        %180 = vperm.xlu0 %179, %v168
        %v181 = vpop.permute.xlu0 %180
        %v183 = vmul.f32 %v169, %v176
        %v184 = vmul.f32 %v170, %v176
        %v185 = vmul.f32 %v171, %v181
        %v186 = vmul.f32 %v172, %v181
        %187 = vst [vmem:[%s162] sm:$0xff] %v183
        %188 = vst [vmem:[%s162 + $0x8] sm:$0xff] %v184
        %189 = vst [vmem:[%s162 + $0x10] sm:$0xff] %v185
        %190 = vst [vmem:[%s162 + $0x18] sm:$0xff] %v186
        %s191 = sand.u32 %s74, 1
        %s192 = scalar_lea.sflag [#allocation4], %s191
        %s193 = sand.u32 %s74, 1
        %s194 = smul.addr %s193, 32
        %s195 = scalar_lea.vmem [#allocation5], %s194
        // Predicated region
        $region33: #{tpu_custom_call.1} parent=27 // pred_check
          %p196 = pneg %p84
        $region34: #{tpu_custom_call.1} parent=27 // pred_check_branch
          %198 = sbr.rel (%p196) target = $region36
        $region35: #{tpu_custom_call.1} parent=27 // pred_region
          %s199 = smul.u32 2, %s19
          %s201 = ssub.s32 512, 512
          %202 = vsyncadd %s192, %s201
          %s203 = smul.addr %s199, 2
          %s204 = smul.addr %s203, 128
          %s205 = scalar_lea.hbm %s2, %s204
          %s206 = sshll.u32 %s195, 4
          %s207 = int_to_ptr.vmem [resolvable:$true] %s206
          %212 = dma.vmem_to_hbm [thread:$0]  %s207, 512, %s205, %s192, 256, 256, 16
        $region36: #{tpu_custom_call.1} parent=27 // pred_fallthru
          _
      $region28: #{tpu_custom_call.1} parent=5 // pred_fallthru
        _
      %p213 = scmp.le.s32.totalorder 2, %s14
      // Predicated region
      $region37: #{tpu_custom_call.1} parent=5 // pred_check
        %p214 = pneg %p213
      $region38: #{tpu_custom_call.1} parent=5 // pred_check_branch
        %216 = sbr.rel (%p214) target = $region40
      $region39: #{tpu_custom_call.1} parent=5 // pred_region
        %s217 = ssub.s32 %s14, 2
        // Predicated region
        $region41: #{tpu_custom_call.1} parent=39 // pred_check
          %p218 = pneg %p90
        $region42: #{tpu_custom_call.1} parent=39 // pred_check_branch
          %220 = sbr.rel (%p218) target = $region44
        $region43: #{tpu_custom_call.1} parent=39 // pred_region
          %s221 = sand.u32 %s75, 1
          %s222 = scalar_lea.sflag [#allocation4], %s221
          %s223 = sand.u32 %s75, 1
          %s224 = smul.addr %s223, 32
          %s225 = scalar_lea.vmem [#allocation5], %s224
          %226 = dma.done %s222, 512
        $region44: #{tpu_custom_call.1} parent=39 // pred_fallthru
          _
      $region40: #{tpu_custom_call.1} parent=5 // pred_fallthru
        _
    $region6: #{tpu_custom_call.1} parent=1 // loop_footer
      %s18 = sadd.s32 1, %s14
    $region7: #{tpu_custom_call.1} parent=1 // loop_footer_branch
      %13 = sbr.rel target = $region3
    $region8: #{tpu_custom_call.1} parent=1 // loop_exit
      _
    %227 = vsyncpa [#allocation3], 1
    %s228 = scalar_lea.sflag [#allocation3], 1
    %229 = vsyncpa %s228, 1
    %230 = vsyncpa [#allocation4], 1
    %s231 = scalar_lea.sflag [#allocation4], 1
    %232 = vsyncpa %s231, 1

</llo_original>
